<compile_context>
chip_gen: v7x
topology: tpu7x:2x2x1
jax: 0.10.0
libtpu: 0.0.40
codegen_flags: <defaults>
</compile_context>

<pallas_src>
import math

import jax
import jax.numpy as jnp
from jax.experimental import pallas as pl
from jax.experimental.pallas import tpu as pltpu


def _build_pe(d_model: int, max_len: int = 5000) -> jnp.ndarray:
    """Replicates the PyTorch __init__: returns pe of shape (max_len, 1, d_model)."""
    position = jnp.arange(0, max_len, dtype=jnp.float32)[:, None]            # (max_len, 1)
    div_term = jnp.exp(
        jnp.arange(0, d_model, 2, dtype=jnp.float32) * (-math.log(10000.0) / d_model)
    )                                                                         # (ceil(d/2),)
    angles = position * div_term                                              # (max_len, ceil(d/2))
    pe = jnp.zeros((max_len, d_model), dtype=jnp.float32)
    pe = pe.at[:, 0::2].set(jnp.sin(angles))
    pe = pe.at[:, 1::2].set(jnp.cos(angles)[:, : d_model // 2])
    # unsqueeze(0).transpose(0, 1) -> (max_len, 1, d_model)
    return pe[:, None, :]


def _pos_enc_kernel(x_ref, pe_ref, o_ref):
    # x_ref/o_ref: (ts, B, td); pe_ref: (ts, 1, td).
    # The add broadcasts pe across the batch (sublane) axis — no materialized
    # replica, no extra VMEM high-water.
    o_ref[...] = x_ref[...].astype(o_ref.dtype) + pe_ref[...].astype(o_ref.dtype)


def _round_up(a: int, b: int) -> int:
    return -(-a // b) * b


def positional_encoding(
    x: jnp.ndarray,
    pe: jnp.ndarray,
    *,
    block_s: int | None = None,
    block_d: int | None = None,
    donate_x: bool = False,
) -> jnp.ndarray:
    """x: (S, B, D); pe: (max_len, 1, D). Returns x + pe[:S] (broadcast over B)."""
    S, B, D = x.shape
    max_len = pe.shape[0]
    assert pe.shape == (max_len, 1, D), "pe must be (max_len, 1, d_model)"
    assert S <= max_len, "sequence longer than positional-encoding table"

    # PyTorch promotion semantics: the add happens in promote(x.dtype, pe.dtype).
    out_dtype = jnp.promote_types(x.dtype, pe.dtype)
    x_item = jnp.dtype(x.dtype).itemsize
    out_item = jnp.dtype(out_dtype).itemsize
    pe_item = jnp.dtype(pe.dtype).itemsize

    # ~4 MiB x-tiles amortize per-grid-step overhead even on v7x HBM while the
    # double-buffered footprint stays far below every chip's VMEM.
    target_tile_bytes = 4 * 1024 * 1024

    # Minor-dim (D) tiling only for very wide rows, and only when D is
    # 128-aligned so stores remain lane-dense.
    if block_d is None:
        block_d = D
        if D % 128 == 0 and 8 * B * D * x_item > 2 * target_tile_bytes:
            block_d = ((target_tile_bytes // max(1, 8 * B * x_item)) // 128) * 128
            block_d = int(min(max(block_d, 128), D))
    block_d = int(min(block_d, D))

    if block_s is None:
        block_s = max(8, (target_tile_bytes // max(1, B * block_d * x_item)) // 8 * 8)
        # Keep >=4 S-steps when the tensor allows it so the pipeline (and v7x
        # megacore sharding) has work to overlap.
        if S >= 32:
            block_s = min(block_s, max(8, _round_up(-(-S // 4), 8)))
    block_s = int(min(block_s, S))

    # VMEM high-water: (x + out + pe) tiles, double buffered, accounting for
    # sublane/lane padding of the small middle/minor dims.
    def _pad_sub(n: int, dt) -> int:
        sub = max(1, 32 // jnp.dtype(dt).itemsize)   # f32->8, bf16->16, i8->32
        return _round_up(n, sub)

    pad_d = _round_up(block_d, 128)
    x_tile = block_s * _pad_sub(B, x.dtype) * pad_d * x_item
    o_tile = block_s * _pad_sub(B, out_dtype) * pad_d * out_item
    pe_tile = block_s * _pad_sub(1, pe.dtype) * pad_d * pe_item
    vmem_limit = int(max(2 * (x_tile + o_tile + pe_tile) + (2 << 20), 16 << 20))

    grid = (pl.cdiv(S, block_s), pl.cdiv(D, block_d))

    io_aliases = {}
    if donate_x and jnp.dtype(x.dtype) == jnp.dtype(out_dtype):
        io_aliases = {0: 0}   # alias x to the output: halves HBM footprint

    return pl.pallas_call(
        _pos_enc_kernel,
        out_shape=jax.ShapeDtypeStruct((S, B, D), out_dtype),
        grid_spec=pltpu.PrefetchScalarGridSpec(
            num_scalar_prefetch=0,
            grid=grid,
            in_specs=[
                pl.BlockSpec((block_s, B, block_d), lambda i, j: (i, 0, j)),   # x tile
                pl.BlockSpec((block_s, 1, block_d), lambda i, j: (i, 0, j)),   # pe rows
            ],
            out_specs=pl.BlockSpec((block_s, B, block_d), lambda i, j: (i, 0, j)),
        ),
        compiler_params=pltpu.CompilerParams(
            dimension_semantics=("parallel", "parallel"),
            vmem_limit_bytes=vmem_limit,
        ),
        input_output_aliases=io_aliases,
    )(x, pe)


if __name__ == "__main__":
    d_model = 32
    max_len = 5000
    batch = 2

    pe = _build_pe(d_model, max_len)
    key = jax.random.PRNGKey(0)

    # 1) f32, multi-step grid along S (block_s=64 -> 4 steps even at toy size).
    seq_len = 256
    x = jax.random.normal(key, (seq_len, batch, d_model), dtype=jnp.float32)
    out = jax.block_until_ready(positional_encoding(x, pe, block_s=64))
    ref = x + pe[:seq_len]
    assert out.shape == (seq_len, batch, d_model) and out.dtype == jnp.float32
    assert jnp.allclose(out, ref, atol=1e-6), "f32 mismatch vs reference"

    # 2) ragged last S block (S not a multiple of block_s).
    seq_ragged = 100
    x2 = jax.random.normal(
        jax.random.fold_in(key, 1), (seq_ragged, batch, d_model), dtype=jnp.float32
    )
    out2 = jax.block_until_ready(positional_encoding(x2, pe, block_s=64))
    assert jnp.allclose(out2, x2 + pe[:seq_ragged], atol=1e-6), "ragged mismatch"

    # 3) bf16 x: add promotes to f32, like the PyTorch module (pe stays f32).
    x3 = x.astype(jnp.bfloat16)
    out3 = jax.block_until_ready(positional_encoding(x3, pe, block_s=64))
    assert out3.dtype == jnp.float32
    assert jnp.allclose(out3, x3.astype(jnp.float32) + pe[:seq_len], atol=1e-6), \
        "bf16-promotion mismatch"

    print("KERNEL_OK")
</pallas_src>

<mosaic_0001>
module attributes {stable_mosaic.version = 11 : i64} {
  func.func @_pos_enc_kernel(%arg0: i32, %arg1: i32, %arg2: memref<64x2x32xf32, #tpu.memory_space<vmem>>, %arg3: memref<64x1x32xf32, #tpu.memory_space<vmem>>, %arg4: memref<64x2x32xf32, #tpu.memory_space<vmem>>) attributes {dimension_semantics = [#tpu.dimension_semantics<parallel>, #tpu.dimension_semantics<parallel>], iteration_bounds = array<i64: 4, 1>, scalar_prefetch = 0 : i64, scratch_operands = 0 : i64, tpu.core_type = #tpu.core_type<tc>, window_params = [{transform_indices = @transform_0, window_bounds = array<i64: 64, 2, 32>}, {transform_indices = @transform_1, window_bounds = array<i64: 64, 1, 32>}, {transform_indices = @transform_2, window_bounds = array<i64: 64, 2, 32>}]} {
    %c0 = arith.constant 0 : index
    %c0_0 = arith.constant 0 : index
    %c0_1 = arith.constant 0 : index
    %0 = vector.load %arg2[%c0, %c0_0, %c0_1] : memref<64x2x32xf32, #tpu.memory_space<vmem>>, vector<64x2x32xf32>
    %c0_2 = arith.constant 0 : index
    %c0_3 = arith.constant 0 : index
    %c0_4 = arith.constant 0 : index
    %1 = vector.load %arg3[%c0_2, %c0_3, %c0_4] : memref<64x1x32xf32, #tpu.memory_space<vmem>>, vector<64x1x32xf32>
    %2 = vector.broadcast %1 : vector<64x1x32xf32> to vector<64x2x32xf32>
    %3 = arith.addf %0, %2 : vector<64x2x32xf32>
    %c0_5 = arith.constant 0 : index
    %c0_6 = arith.constant 0 : index
    %c0_7 = arith.constant 0 : index
    %4 = vector.load %arg4[%c0_5, %c0_6, %c0_7] : memref<64x2x32xf32, #tpu.memory_space<vmem>>, vector<64x2x32xf32>
    tpu.vector_store %arg4[%c0_5, %c0_6, %c0_7], %3 {strides = array<i32>} : memref<64x2x32xf32, #tpu.memory_space<vmem>>, vector<64x2x32xf32>,
    return
  }
  func.func @transform_0(%arg0: i32, %arg1: i32) -> (i32, i32, i32) {
    %c0_i32 = arith.constant 0 : i32
    %c0_i32_0 = arith.constant 0 : i32
    return %arg0, %c0_i32, %arg1 : i32, i32, i32
  }
  func.func @transform_1(%arg0: i32, %arg1: i32) -> (i32, i32, i32) {
    %c0_i32 = arith.constant 0 : i32
    %c0_i32_0 = arith.constant 0 : i32
    return %arg0, %c0_i32, %arg1 : i32, i32, i32
  }
  func.func @transform_2(%arg0: i32, %arg1: i32) -> (i32, i32, i32) {
    %c0_i32 = arith.constant 0 : i32
    %c0_i32_0 = arith.constant 0 : i32
    return %arg0, %c0_i32, %arg1 : i32, i32, i32
  }
}

</mosaic_0001>

<llo_original>
// kernel: tpu_custom_call.1
$region0: #{tpu_custom_call.1}
  #allocation0 [shape = 'u32[]', space=smem, size = 0x4, offset = 0x4, fixed_abs, tag = 'smem constant byte address 0x4 - core index']
  #allocation1 [shape = 'u32[144,128]{1,0:T(1,128)}', space=vmem, size = 0x12000, scoped, tag = 'internal scratch']
  %s0 = inlined_call_operand.vmem [shape: f32[256,2,32], index: 0, kind: input, shape index: {}]
  %s1 = inlined_call_operand.vmem [shape: f32[5000,1,32], index: 1, kind: input, shape index: {}]
  %s2 = inlined_call_operand.vmem [shape: f32[256,2,32], index: 2, kind: output, shape index: {}]
  %s3 = sld [smem:[#allocation0]]
  $region41: #{tpu_custom_call.1} parent=0
    _
  %s5 = ssub.s32 1, %s3
  %s6 = scalar_select 0, %s5, %s3
  loop: start=0, step=1, limit=6
  $region2: #{tpu_custom_call.1} parent=0 // loop_pre_header
    _
  $region3: #{tpu_custom_call.1} parent=0 // loop_header
    %s8 = sphi 0, %s12
    %p9 = scmp.ge.s32.totalorder %s8, 6
    %s15 = sphi 0, %s27
    %s16 = sphi 0, %s23
    %s17 = sphi 0, %s15
    %s18 = sphi 0, %s16
    %s19 = sphi 0, %s17
    %s20 = sphi 0, %s18
    %s32 = sphi 0, %s34
    %s35 = sphi 0, %s32
    %s36 = sphi 0, %s35
    %s52 = sphi 0, %s36
    %s60 = sphi 0, %s62
    %s63 = sphi 0, %s60
    %s64 = sphi 0, %s63
    %s80 = sphi 0, %s64
    %s88 = sphi 0, %s90
    %s91 = sphi 0, %s88
    %s92 = sphi 0, %s91
    %s108 = sphi 0, %s92
  $region4: #{tpu_custom_call.1} parent=0 // loop_header_branch
    %11 = sbr.rel (%p9) target = $region8
  $region5: #{tpu_custom_call.1} parent=0 // loop_body
    %s13 = ssub.s32 %s8, 1
    %s14 = ssub.s32 %s8, 2
    %s21 = sadd.s32 1, %s16
    %p22 = scmp.ge.s32.totalorder %s21, 1
    %s23 = scalar_select %p22, 0, %s21
    %s24 = sadd.s32 1, %s15
    %s25 = scalar_select %p22, %s24, %s15
    %p26 = scmp.ge.s32.totalorder %s25, 4
    %s27 = scalar_select %p26, 0, %s25
    %s28 = ssub.s32 %s15, %s27
    %s29 = ssub.s32 %s16, %s23
    %s30 = sor.u32 %s28, %s29
    %p31 = scmp.eq.s32.totalorder %s30, 0
    %s33 = sadd.s32 %s32, 1
    %s34 = scalar_select %p31, %s32, %s33
    %p37 = pneg %p31
    %p38 = scmp.eq.s32.totalorder %s8, 3
    %p39 = por %p37, %p38
    %p40 = scmp.ne.s32.totalorder %s32, %s35
    %p41 = scmp.eq.s32.totalorder %s8, 0
    %p42 = por %p40, %p41
    %p43 = scmp.ne.s32.totalorder %s32, %s35
    %p44 = scmp.eq.s32.totalorder %s13, 3
    %p45 = por %p43, %p44
    %p46 = scmp.ne.s32.totalorder %s35, %s36
    %p47 = scmp.eq.s32.totalorder %s13, 0
    %p48 = por %p46, %p47
    %p49 = scmp.ne.s32.totalorder %s35, %s36
    %p50 = scmp.eq.s32.totalorder %s14, 3
    %p51 = por %p49, %p50
    %p53 = scmp.ne.s32.totalorder %s36, %s52
    %p54 = scmp.eq.s32.totalorder %s14, 0
    %p55 = por %p53, %p54
    %s56 = ssub.s32 %s15, %s27
    %s57 = ssub.s32 %s16, %s23
    %s58 = sor.u32 %s56, %s57
    %p59 = scmp.eq.s32.totalorder %s58, 0
    %s61 = sadd.s32 %s60, 1
    %s62 = scalar_select %p59, %s60, %s61
    %p65 = pneg %p59
    %p66 = scmp.eq.s32.totalorder %s8, 3
    %p67 = por %p65, %p66
    %p68 = scmp.ne.s32.totalorder %s60, %s63
    %p69 = scmp.eq.s32.totalorder %s8, 0
    %p70 = por %p68, %p69
    %p71 = scmp.ne.s32.totalorder %s60, %s63
    %p72 = scmp.eq.s32.totalorder %s13, 3
    %p73 = por %p71, %p72
    %p74 = scmp.ne.s32.totalorder %s63, %s64
    %p75 = scmp.eq.s32.totalorder %s13, 0
    %p76 = por %p74, %p75
    %p77 = scmp.ne.s32.totalorder %s63, %s64
    %p78 = scmp.eq.s32.totalorder %s14, 3
    %p79 = por %p77, %p78
    %p81 = scmp.ne.s32.totalorder %s64, %s80
    %p82 = scmp.eq.s32.totalorder %s14, 0
    %p83 = por %p81, %p82
    %s84 = ssub.s32 %s15, %s27
    %s85 = ssub.s32 %s16, %s23
    %s86 = sor.u32 %s84, %s85
    %p87 = scmp.eq.s32.totalorder %s86, 0
    %s89 = sadd.s32 %s88, 1
    %s90 = scalar_select %p87, %s88, %s89
    %p93 = pneg %p87
    %p94 = scmp.eq.s32.totalorder %s8, 3
    %p95 = por %p93, %p94
    %p96 = scmp.ne.s32.totalorder %s88, %s91
    %p97 = scmp.eq.s32.totalorder %s8, 0
    %p98 = por %p96, %p97
    %p99 = scmp.ne.s32.totalorder %s88, %s91
    %p100 = scmp.eq.s32.totalorder %s13, 3
    %p101 = por %p99, %p100
    %p102 = scmp.ne.s32.totalorder %s91, %s92
    %p103 = scmp.eq.s32.totalorder %s13, 0
    %p104 = por %p102, %p103
    %p105 = scmp.ne.s32.totalorder %s91, %s92
    %p106 = scmp.eq.s32.totalorder %s14, 3
    %p107 = por %p105, %p106
    %p109 = scmp.ne.s32.totalorder %s92, %s108
    %p110 = scmp.eq.s32.totalorder %s14, 0
    %p111 = por %p109, %p110
    %p112 = scmp.le.s32.totalorder 1, %s8
    %p113 = scmp.lt.s32.totalorder %s8, 5
    %p114 = pnand %p112, %p113
    %p115 = pneg %p114
    // Predicated region
    $region9: #{tpu_custom_call.1} parent=5 // pred_check
      _
    $region10: #{tpu_custom_call.1} parent=5 // pred_check_branch
      %117 = sbr.rel (%p114) target = $region12
    $region11: #{tpu_custom_call.1} parent=5 // pred_region
      %s118 = ssub.s32 %s8, 1
    $region12: #{tpu_custom_call.1} parent=5 // pred_fallthru
      _
    %p119 = scmp.lt.s32.totalorder %s8, 4
    // Predicated region
    $region13: #{tpu_custom_call.1} parent=5 // pred_check
      %p120 = pneg %p119
    $region14: #{tpu_custom_call.1} parent=5 // pred_check_branch
      %122 = sbr.rel (%p120) target = $region16
    $region15: #{tpu_custom_call.1} parent=5 // pred_region
      // Predicated region
      $region17: #{tpu_custom_call.1} parent=15 // pred_check
        %p123 = pneg %p42
      $region18: #{tpu_custom_call.1} parent=15 // pred_check_branch
        %125 = sbr.rel (%p123) target = $region20
      $region19: #{tpu_custom_call.1} parent=15 // pred_region
        %s126 = smul.u32 64, %s15
        %p127 = scmp.lt.s32.totalorder %s126, 255
        %s128 = scalar_select %p127, %s126, 255
        %p129 = scmp.lt.s32.totalorder %s16, 0
        %s130 = scalar_select %p129, %s16, 0
        %s131 = sadd.s32 %s130, %s128
        %s132 = smul.addr %s131, 2
        %s133 = scalar_lea.vmem %s0, %s132
        %s134 = smul.u32 64, %s15
      $region20: #{tpu_custom_call.1} parent=15 // pred_fallthru
        _
      // Predicated region
      $region21: #{tpu_custom_call.1} parent=15 // pred_check
        %p135 = pneg %p70
      $region22: #{tpu_custom_call.1} parent=15 // pred_check_branch
        %137 = sbr.rel (%p135) target = $region24
      $region23: #{tpu_custom_call.1} parent=15 // pred_region
        %s138 = smul.u32 64, %s15
        %s139 = ssub.s32 5000, %s138
        %p140 = scmp.lt.s32.totalorder %s139, 64
        %s141 = scalar_select %p140, %s139, 64
        %s142 = smul.u32 16, %s141
        %p143 = scmp.lt.s32.totalorder %s138, 4999
        %s144 = scalar_select %p143, %s138, 4999
        %p145 = scmp.lt.s32.totalorder %s16, 0
        %s146 = scalar_select %p145, %s16, 0
        %s147 = sadd.s32 %s146, %s144
        %s148 = scalar_lea.vmem %s1, %s147
        %s149 = smul.u32 64, %s15
        %s150 = ssub.s32 5000, %s149
        %p151 = scmp.lt.s32.totalorder %s150, 64
        %s152 = scalar_select %p151, %s150, 64
        %s153 = smul.u32 16, %s152
      $region24: #{tpu_custom_call.1} parent=15 // pred_fallthru
        _
    $region16: #{tpu_custom_call.1} parent=5 // pred_fallthru
      _
    %p154 = scmp.le.s32.totalorder 1, %s8
    %p155 = scmp.lt.s32.totalorder %s8, 5
    %p156 = pnand %p154, %p155
    %p157 = pneg %p156
    // Predicated region
    $region25: #{tpu_custom_call.1} parent=5 // pred_check
      _
    $region26: #{tpu_custom_call.1} parent=5 // pred_check_branch
      %159 = sbr.rel (%p156) target = $region28
    $region27: #{tpu_custom_call.1} parent=5 // pred_region
      %s160 = ssub.s32 %s8, 1
      %s161 = smul.u32 64, %s17
      %p162 = scmp.lt.s32.totalorder %s161, 255
      %s163 = scalar_select %p162, %s161, 255
      %p164 = scmp.lt.s32.totalorder %s18, 0
      %s165 = scalar_select %p164, %s18, 0
      %s166 = sadd.s32 %s165, %s163
      %s167 = smul.addr %s166, 2
      %s168 = scalar_lea.vmem %s0, %s167
      %p169 = pneg %p48
      %p170 = pneg %p45
      %s171 = smul.u32 64, %s17
      %s172 = ssub.s32 5000, %s171
      %p173 = scmp.lt.s32.totalorder %s172, 64
      %s174 = scalar_select %p173, %s172, 64
      %s175 = smul.u32 16, %s174
      %p176 = scmp.lt.s32.totalorder %s171, 4999
      %s177 = scalar_select %p176, %s171, 4999
      %p178 = scmp.lt.s32.totalorder %s18, 0
      %s179 = scalar_select %p178, %s18, 0
      %s180 = sadd.s32 %s179, %s177
      %s181 = scalar_lea.vmem %s1, %s180
      %p182 = pneg %p76
      %p183 = pneg %p73
      %p184 = pneg %p104
      %p185 = pneg %p101
      %s186 = smul.u32 64, %s17
      %p187 = scmp.lt.s32.totalorder %s186, 255
      %s188 = scalar_select %p187, %s186, 255
      %p189 = scmp.lt.s32.totalorder %s18, 0
      %s190 = scalar_select %p189, %s18, 0
      %s191 = sadd.s32 %s190, %s188
      %s192 = smul.addr %s191, 2
      %s193 = scalar_lea.vmem %s2, %s192
      %s194 = smul.u32 64, %s17
      %p195 = scmp.lt.s32.totalorder %s194, 255
      %s196 = scalar_select %p195, %s194, 255
      %p197 = scmp.lt.s32.totalorder %s18, 0
      %s198 = scalar_select %p197, %s18, 0
      %s199 = sadd.s32 %s198, %s196
      %s200 = smul.addr %s199, 2
      %s201 = scalar_lea.vmem %s0, %s200
      %s202 = smul.u32 64, %s17
      %s203 = smul.u32 64, %s17
      %s204 = ssub.s32 5000, %s203
      %p205 = scmp.lt.s32.totalorder %s204, 64
      %s206 = scalar_select %p205, %s204, 64
      %s207 = smul.u32 16, %s206
      %p208 = scmp.lt.s32.totalorder %s203, 4999
      %s209 = scalar_select %p208, %s203, 4999
      %p210 = scmp.lt.s32.totalorder %s18, 0
      %s211 = scalar_select %p210, %s18, 0
      %s212 = sadd.s32 %s211, %s209
      %s213 = scalar_lea.vmem %s1, %s212
      %s214 = smul.u32 64, %s17
      %s215 = ssub.s32 5000, %s214
      %p216 = scmp.lt.s32.totalorder %s215, 64
      %s217 = scalar_select %p216, %s215, 64
      %s218 = smul.u32 16, %s217
      %s219 = smul.u32 64, %s17
      %p220 = scmp.lt.s32.totalorder %s219, 255
      %s221 = scalar_select %p220, %s219, 255
      %p222 = scmp.lt.s32.totalorder %s18, 0
      %s223 = scalar_select %p222, %s18, 0
      %s224 = sadd.s32 %s223, %s221
      %s225 = smul.addr %s224, 2
      %s226 = scalar_lea.vmem %s2, %s225
      %s227 = smul.u32 64, %s17
      %v228 = vld [vmem:[%s201] sm:$0x3]
      %v229 = vld [vmem:[%s201 + $0x2] sm:$0x3]
      %v230 = vld [vmem:[%s201 + $0x4] sm:$0x3]
      %v231 = vld [vmem:[%s201 + $0x6] sm:$0x3]
      %v232 = vld [vmem:[%s201 + $0x8] sm:$0x3]
      %v233 = vld [vmem:[%s201 + $0xa] sm:$0x3]
      %v234 = vld [vmem:[%s201 + $0xc] sm:$0x3]
      %v235 = vld [vmem:[%s201 + $0xe] sm:$0x3]
      %v236 = vld [vmem:[%s201 + $0x10] sm:$0x3]
      %v237 = vld [vmem:[%s201 + $0x12] sm:$0x3]
      %v238 = vld [vmem:[%s201 + $0x14] sm:$0x3]
      %v239 = vld [vmem:[%s201 + $0x16] sm:$0x3]
      %v240 = vld [vmem:[%s201 + $0x18] sm:$0x3]
      %v241 = vld [vmem:[%s201 + $0x1a] sm:$0x3]
      %v242 = vld [vmem:[%s201 + $0x1c] sm:$0x3]
      %v243 = vld [vmem:[%s201 + $0x1e] sm:$0x3]
      %v244 = vld [vmem:[%s201 + $0x20] sm:$0x3]
      %v245 = vld [vmem:[%s201 + $0x22] sm:$0x3]
      %v246 = vld [vmem:[%s201 + $0x24] sm:$0x3]
      %v247 = vld [vmem:[%s201 + $0x26] sm:$0x3]
      %v248 = vld [vmem:[%s201 + $0x28] sm:$0x3]
      %v249 = vld [vmem:[%s201 + $0x2a] sm:$0x3]
      %v250 = vld [vmem:[%s201 + $0x2c] sm:$0x3]
      %v251 = vld [vmem:[%s201 + $0x2e] sm:$0x3]
      %v252 = vld [vmem:[%s201 + $0x30] sm:$0x3]
      %v253 = vld [vmem:[%s201 + $0x32] sm:$0x3]
      %v254 = vld [vmem:[%s201 + $0x34] sm:$0x3]
      %v255 = vld [vmem:[%s201 + $0x36] sm:$0x3]
      %v256 = vld [vmem:[%s201 + $0x38] sm:$0x3]
      %v257 = vld [vmem:[%s201 + $0x3a] sm:$0x3]
      %v258 = vld [vmem:[%s201 + $0x3c] sm:$0x3]
      %v259 = vld [vmem:[%s201 + $0x3e] sm:$0x3]
      %v260 = vld [vmem:[%s201 + $0x40] sm:$0x3]
      %v261 = vld [vmem:[%s201 + $0x42] sm:$0x3]
      %v262 = vld [vmem:[%s201 + $0x44] sm:$0x3]
      %v263 = vld [vmem:[%s201 + $0x46] sm:$0x3]
      %v264 = vld [vmem:[%s201 + $0x48] sm:$0x3]
      %v265 = vld [vmem:[%s201 + $0x4a] sm:$0x3]
      %v266 = vld [vmem:[%s201 + $0x4c] sm:$0x3]
      %v267 = vld [vmem:[%s201 + $0x4e] sm:$0x3]
      %v268 = vld [vmem:[%s201 + $0x50] sm:$0x3]
      %v269 = vld [vmem:[%s201 + $0x52] sm:$0x3]
      %v270 = vld [vmem:[%s201 + $0x54] sm:$0x3]
      %v271 = vld [vmem:[%s201 + $0x56] sm:$0x3]
      %v272 = vld [vmem:[%s201 + $0x58] sm:$0x3]
      %v273 = vld [vmem:[%s201 + $0x5a] sm:$0x3]
      %v274 = vld [vmem:[%s201 + $0x5c] sm:$0x3]
      %v275 = vld [vmem:[%s201 + $0x5e] sm:$0x3]
      %v276 = vld [vmem:[%s201 + $0x60] sm:$0x3]
      %v277 = vld [vmem:[%s201 + $0x62] sm:$0x3]
      %v278 = vld [vmem:[%s201 + $0x64] sm:$0x3]
      %v279 = vld [vmem:[%s201 + $0x66] sm:$0x3]
      %v280 = vld [vmem:[%s201 + $0x68] sm:$0x3]
      %v281 = vld [vmem:[%s201 + $0x6a] sm:$0x3]
      %v282 = vld [vmem:[%s201 + $0x6c] sm:$0x3]
      %v283 = vld [vmem:[%s201 + $0x6e] sm:$0x3]
      %v284 = vld [vmem:[%s201 + $0x70] sm:$0x3]
      %v285 = vld [vmem:[%s201 + $0x72] sm:$0x3]
      %v286 = vld [vmem:[%s201 + $0x74] sm:$0x3]
      %v287 = vld [vmem:[%s201 + $0x76] sm:$0x3]
      %v288 = vld [vmem:[%s201 + $0x78] sm:$0x3]
      %v289 = vld [vmem:[%s201 + $0x7a] sm:$0x3]
      %v290 = vld [vmem:[%s201 + $0x7c] sm:$0x3]
      %v291 = vld [vmem:[%s201 + $0x7e] sm:$0x3]
      %v292 = vld [vmem:[%s213] sm:$0x1]
      %v293 = vld [vmem:[%s213 + $0x1] sm:$0x1]
      %v294 = vld [vmem:[%s213 + $0x2] sm:$0x1]
      %v295 = vld [vmem:[%s213 + $0x3] sm:$0x1]
      %v296 = vld [vmem:[%s213 + $0x4] sm:$0x1]
      %v297 = vld [vmem:[%s213 + $0x5] sm:$0x1]
      %v298 = vld [vmem:[%s213 + $0x6] sm:$0x1]
      %v299 = vld [vmem:[%s213 + $0x7] sm:$0x1]
      %v300 = vld [vmem:[%s213 + $0x8] sm:$0x1]
      %v301 = vld [vmem:[%s213 + $0x9] sm:$0x1]
      %v302 = vld [vmem:[%s213 + $0xa] sm:$0x1]
      %v303 = vld [vmem:[%s213 + $0xb] sm:$0x1]
      %v304 = vld [vmem:[%s213 + $0xc] sm:$0x1]
      %v305 = vld [vmem:[%s213 + $0xd] sm:$0x1]
      %v306 = vld [vmem:[%s213 + $0xe] sm:$0x1]
      %v307 = vld [vmem:[%s213 + $0xf] sm:$0x1]
      %v308 = vld [vmem:[%s213 + $0x10] sm:$0x1]
      %v309 = vld [vmem:[%s213 + $0x11] sm:$0x1]
      %v310 = vld [vmem:[%s213 + $0x12] sm:$0x1]
      %v311 = vld [vmem:[%s213 + $0x13] sm:$0x1]
      %v312 = vld [vmem:[%s213 + $0x14] sm:$0x1]
      %v313 = vld [vmem:[%s213 + $0x15] sm:$0x1]
      %v314 = vld [vmem:[%s213 + $0x16] sm:$0x1]
      %v315 = vld [vmem:[%s213 + $0x17] sm:$0x1]
      %v316 = vld [vmem:[%s213 + $0x18] sm:$0x1]
      %v317 = vld [vmem:[%s213 + $0x19] sm:$0x1]
      %v318 = vld [vmem:[%s213 + $0x1a] sm:$0x1]
      %v319 = vld [vmem:[%s213 + $0x1b] sm:$0x1]
      %v320 = vld [vmem:[%s213 + $0x1c] sm:$0x1]
      %v321 = vld [vmem:[%s213 + $0x1d] sm:$0x1]
      %v322 = vld [vmem:[%s213 + $0x1e] sm:$0x1]
      %v323 = vld [vmem:[%s213 + $0x1f] sm:$0x1]
      %v324 = vld [vmem:[%s213 + $0x20] sm:$0x1]
      %v325 = vld [vmem:[%s213 + $0x21] sm:$0x1]
      %v326 = vld [vmem:[%s213 + $0x22] sm:$0x1]
      %v327 = vld [vmem:[%s213 + $0x23] sm:$0x1]
      %v328 = vld [vmem:[%s213 + $0x24] sm:$0x1]
      %v329 = vld [vmem:[%s213 + $0x25] sm:$0x1]
      %v330 = vld [vmem:[%s213 + $0x26] sm:$0x1]
      %v331 = vld [vmem:[%s213 + $0x27] sm:$0x1]
      %v332 = vld [vmem:[%s213 + $0x28] sm:$0x1]
      %v333 = vld [vmem:[%s213 + $0x29] sm:$0x1]
      %v334 = vld [vmem:[%s213 + $0x2a] sm:$0x1]
      %v335 = vld [vmem:[%s213 + $0x2b] sm:$0x1]
      %v336 = vld [vmem:[%s213 + $0x2c] sm:$0x1]
      %v337 = vld [vmem:[%s213 + $0x2d] sm:$0x1]
      %v338 = vld [vmem:[%s213 + $0x2e] sm:$0x1]
      %v339 = vld [vmem:[%s213 + $0x2f] sm:$0x1]
      %v340 = vld [vmem:[%s213 + $0x30] sm:$0x1]
      %v341 = vld [vmem:[%s213 + $0x31] sm:$0x1]
      %v342 = vld [vmem:[%s213 + $0x32] sm:$0x1]
      %v343 = vld [vmem:[%s213 + $0x33] sm:$0x1]
      %v344 = vld [vmem:[%s213 + $0x34] sm:$0x1]
      %v345 = vld [vmem:[%s213 + $0x35] sm:$0x1]
      %v346 = vld [vmem:[%s213 + $0x36] sm:$0x1]
      %v347 = vld [vmem:[%s213 + $0x37] sm:$0x1]
      %v348 = vld [vmem:[%s213 + $0x38] sm:$0x1]
      %v349 = vld [vmem:[%s213 + $0x39] sm:$0x1]
      %v350 = vld [vmem:[%s213 + $0x3a] sm:$0x1]
      %v351 = vld [vmem:[%s213 + $0x3b] sm:$0x1]
      %v352 = vld [vmem:[%s213 + $0x3c] sm:$0x1]
      %v353 = vld [vmem:[%s213 + $0x3d] sm:$0x1]
      %v354 = vld [vmem:[%s213 + $0x3e] sm:$0x1]
      %v355 = vld [vmem:[%s213 + $0x3f] sm:$0x1]
      %v420 = vlaneseq
      %v421 = vshrl.u32 %v420, 7
      %v422 = vsub.s32 0, %v421
      %v423 = vrot.slane %v292, %v422
      %v424 = vlaneseq
      %v425 = vshrl.u32 %v424, 7
      %v426 = vsub.s32 0, %v425
      %v427 = vrot.slane %v293, %v426
      %v428 = vlaneseq
      %v429 = vshrl.u32 %v428, 7
      %v430 = vsub.s32 0, %v429
      %v431 = vrot.slane %v294, %v430
      %v432 = vlaneseq
      %v433 = vshrl.u32 %v432, 7
      %v434 = vsub.s32 0, %v433
      %v435 = vrot.slane %v295, %v434
      %v436 = vlaneseq
      %v437 = vshrl.u32 %v436, 7
      %v438 = vsub.s32 0, %v437
      %v439 = vrot.slane %v296, %v438
      %v440 = vlaneseq
      %v441 = vshrl.u32 %v440, 7
      %v442 = vsub.s32 0, %v441
      %v443 = vrot.slane %v297, %v442
      %v444 = vlaneseq
      %v445 = vshrl.u32 %v444, 7
      %v446 = vsub.s32 0, %v445
      %v447 = vrot.slane %v298, %v446
      %v448 = vlaneseq
      %v449 = vshrl.u32 %v448, 7
      %v450 = vsub.s32 0, %v449
      %v451 = vrot.slane %v299, %v450
      %v452 = vlaneseq
      %v453 = vshrl.u32 %v452, 7
      %v454 = vsub.s32 0, %v453
      %v455 = vrot.slane %v300, %v454
      %v456 = vlaneseq
      %v457 = vshrl.u32 %v456, 7
      %v458 = vsub.s32 0, %v457
      %v459 = vrot.slane %v301, %v458
      %v460 = vlaneseq
      %v461 = vshrl.u32 %v460, 7
      %v462 = vsub.s32 0, %v461
      %v463 = vrot.slane %v302, %v462
      %v464 = vlaneseq
      %v465 = vshrl.u32 %v464, 7
      %v466 = vsub.s32 0, %v465
      %v467 = vrot.slane %v303, %v466
      %v468 = vlaneseq
      %v469 = vshrl.u32 %v468, 7
      %v470 = vsub.s32 0, %v469
      %v471 = vrot.slane %v304, %v470
      %v472 = vlaneseq
      %v473 = vshrl.u32 %v472, 7
      %v474 = vsub.s32 0, %v473
      %v475 = vrot.slane %v305, %v474
      %v476 = vlaneseq
      %v477 = vshrl.u32 %v476, 7
      %v478 = vsub.s32 0, %v477
      %v479 = vrot.slane %v306, %v478
      %v480 = vlaneseq
      %v481 = vshrl.u32 %v480, 7
      %v482 = vsub.s32 0, %v481
      %v483 = vrot.slane %v307, %v482
      %v484 = vlaneseq
      %v485 = vshrl.u32 %v484, 7
      %v486 = vsub.s32 0, %v485
      %v487 = vrot.slane %v308, %v486
      %v488 = vlaneseq
      %v489 = vshrl.u32 %v488, 7
      %v490 = vsub.s32 0, %v489
      %v491 = vrot.slane %v309, %v490
      %v492 = vlaneseq
      %v493 = vshrl.u32 %v492, 7
      %v494 = vsub.s32 0, %v493
      %v495 = vrot.slane %v310, %v494
      %v496 = vlaneseq
      %v497 = vshrl.u32 %v496, 7
      %v498 = vsub.s32 0, %v497
      %v499 = vrot.slane %v311, %v498
      %v500 = vlaneseq
      %v501 = vshrl.u32 %v500, 7
      %v502 = vsub.s32 0, %v501
      %v503 = vrot.slane %v312, %v502
      %v504 = vlaneseq
      %v505 = vshrl.u32 %v504, 7
      %v506 = vsub.s32 0, %v505
      %v507 = vrot.slane %v313, %v506
      %v508 = vlaneseq
      %v509 = vshrl.u32 %v508, 7
      %v510 = vsub.s32 0, %v509
      %v511 = vrot.slane %v314, %v510
      %v512 = vlaneseq
      %v513 = vshrl.u32 %v512, 7
      %v514 = vsub.s32 0, %v513
      %v515 = vrot.slane %v315, %v514
      %v516 = vlaneseq
      %v517 = vshrl.u32 %v516, 7
      %v518 = vsub.s32 0, %v517
      %v519 = vrot.slane %v316, %v518
      %v520 = vlaneseq
      %v521 = vshrl.u32 %v520, 7
      %v522 = vsub.s32 0, %v521
      %v523 = vrot.slane %v317, %v522
      %v524 = vlaneseq
      %v525 = vshrl.u32 %v524, 7
      %v526 = vsub.s32 0, %v525
      %v527 = vrot.slane %v318, %v526
      %v528 = vlaneseq
      %v529 = vshrl.u32 %v528, 7
      %v530 = vsub.s32 0, %v529
      %v531 = vrot.slane %v319, %v530
      %v532 = vlaneseq
      %v533 = vshrl.u32 %v532, 7
      %v534 = vsub.s32 0, %v533
      %v535 = vrot.slane %v320, %v534
      %v536 = vlaneseq
      %v537 = vshrl.u32 %v536, 7
      %v538 = vsub.s32 0, %v537
      %v539 = vrot.slane %v321, %v538
      %v540 = vlaneseq
      %v541 = vshrl.u32 %v540, 7
      %v542 = vsub.s32 0, %v541
      %v543 = vrot.slane %v322, %v542
      %v544 = vlaneseq
      %v545 = vshrl.u32 %v544, 7
      %v546 = vsub.s32 0, %v545
      %v547 = vrot.slane %v323, %v546
      %v548 = vlaneseq
      %v549 = vshrl.u32 %v548, 7
      %v550 = vsub.s32 0, %v549
      %v551 = vrot.slane %v324, %v550
      %v552 = vlaneseq
      %v553 = vshrl.u32 %v552, 7
      %v554 = vsub.s32 0, %v553
      %v555 = vrot.slane %v325, %v554
      %v556 = vlaneseq
      %v557 = vshrl.u32 %v556, 7
      %v558 = vsub.s32 0, %v557
      %v559 = vrot.slane %v326, %v558
      %v560 = vlaneseq
      %v561 = vshrl.u32 %v560, 7
      %v562 = vsub.s32 0, %v561
      %v563 = vrot.slane %v327, %v562
      %v564 = vlaneseq
      %v565 = vshrl.u32 %v564, 7
      %v566 = vsub.s32 0, %v565
      %v567 = vrot.slane %v328, %v566
      %v568 = vlaneseq
      %v569 = vshrl.u32 %v568, 7
      %v570 = vsub.s32 0, %v569
      %v571 = vrot.slane %v329, %v570
      %v572 = vlaneseq
      %v573 = vshrl.u32 %v572, 7
      %v574 = vsub.s32 0, %v573
      %v575 = vrot.slane %v330, %v574
      %v576 = vlaneseq
      %v577 = vshrl.u32 %v576, 7
      %v578 = vsub.s32 0, %v577
      %v579 = vrot.slane %v331, %v578
      %v580 = vlaneseq
      %v581 = vshrl.u32 %v580, 7
      %v582 = vsub.s32 0, %v581
      %v583 = vrot.slane %v332, %v582
      %v584 = vlaneseq
      %v585 = vshrl.u32 %v584, 7
      %v586 = vsub.s32 0, %v585
      %v587 = vrot.slane %v333, %v586
      %v588 = vlaneseq
      %v589 = vshrl.u32 %v588, 7
      %v590 = vsub.s32 0, %v589
      %v591 = vrot.slane %v334, %v590
      %v592 = vlaneseq
      %v593 = vshrl.u32 %v592, 7
      %v594 = vsub.s32 0, %v593
      %v595 = vrot.slane %v335, %v594
      %v596 = vlaneseq
      %v597 = vshrl.u32 %v596, 7
      %v598 = vsub.s32 0, %v597
      %v599 = vrot.slane %v336, %v598
      %v600 = vlaneseq
      %v601 = vshrl.u32 %v600, 7
      %v602 = vsub.s32 0, %v601
      %v603 = vrot.slane %v337, %v602
      %v604 = vlaneseq
      %v605 = vshrl.u32 %v604, 7
      %v606 = vsub.s32 0, %v605
      %v607 = vrot.slane %v338, %v606
      %v608 = vlaneseq
      %v609 = vshrl.u32 %v608, 7
      %v610 = vsub.s32 0, %v609
      %v611 = vrot.slane %v339, %v610
      %v612 = vlaneseq
      %v613 = vshrl.u32 %v612, 7
      %v614 = vsub.s32 0, %v613
      %v615 = vrot.slane %v340, %v614
      %v616 = vlaneseq
      %v617 = vshrl.u32 %v616, 7
      %v618 = vsub.s32 0, %v617
      %v619 = vrot.slane %v341, %v618
      %v620 = vlaneseq
      %v621 = vshrl.u32 %v620, 7
      %v622 = vsub.s32 0, %v621
      %v623 = vrot.slane %v342, %v622
      %v624 = vlaneseq
      %v625 = vshrl.u32 %v624, 7
      %v626 = vsub.s32 0, %v625
      %v627 = vrot.slane %v343, %v626
      %v628 = vlaneseq
      %v629 = vshrl.u32 %v628, 7
      %v630 = vsub.s32 0, %v629
      %v631 = vrot.slane %v344, %v630
      %v632 = vlaneseq
      %v633 = vshrl.u32 %v632, 7
      %v634 = vsub.s32 0, %v633
      %v635 = vrot.slane %v345, %v634
      %v636 = vlaneseq
      %v637 = vshrl.u32 %v636, 7
      %v638 = vsub.s32 0, %v637
      %v639 = vrot.slane %v346, %v638
      %v640 = vlaneseq
      %v641 = vshrl.u32 %v640, 7
      %v642 = vsub.s32 0, %v641
      %v643 = vrot.slane %v347, %v642
      %v644 = vlaneseq
      %v645 = vshrl.u32 %v644, 7
      %v646 = vsub.s32 0, %v645
      %v647 = vrot.slane %v348, %v646
      %v648 = vlaneseq
      %v649 = vshrl.u32 %v648, 7
      %v650 = vsub.s32 0, %v649
      %v651 = vrot.slane %v349, %v650
      %v652 = vlaneseq
      %v653 = vshrl.u32 %v652, 7
      %v654 = vsub.s32 0, %v653
      %v655 = vrot.slane %v350, %v654
      %v656 = vlaneseq
      %v657 = vshrl.u32 %v656, 7
      %v658 = vsub.s32 0, %v657
      %v659 = vrot.slane %v351, %v658
      %v660 = vlaneseq
      %v661 = vshrl.u32 %v660, 7
      %v662 = vsub.s32 0, %v661
      %v663 = vrot.slane %v352, %v662
      %v664 = vlaneseq
      %v665 = vshrl.u32 %v664, 7
      %v666 = vsub.s32 0, %v665
      %v667 = vrot.slane %v353, %v666
      %v668 = vlaneseq
      %v669 = vshrl.u32 %v668, 7
      %v670 = vsub.s32 0, %v669
      %v671 = vrot.slane %v354, %v670
      %v672 = vlaneseq
      %v673 = vshrl.u32 %v672, 7
      %v674 = vsub.s32 0, %v673
      %v675 = vrot.slane %v355, %v674
      %v740 = vadd.f32 %v228, %v423
      %v741 = vadd.f32 %v229, %v427
      %v742 = vadd.f32 %v230, %v431
      %v743 = vadd.f32 %v231, %v435
      %v744 = vadd.f32 %v232, %v439
      %v745 = vadd.f32 %v233, %v443
      %v746 = vadd.f32 %v234, %v447
      %v747 = vadd.f32 %v235, %v451
      %v748 = vadd.f32 %v236, %v455
      %v749 = vadd.f32 %v237, %v459
      %v750 = vadd.f32 %v238, %v463
      %v751 = vadd.f32 %v239, %v467
      %v752 = vadd.f32 %v240, %v471
      %v753 = vadd.f32 %v241, %v475
      %v754 = vadd.f32 %v242, %v479
      %v755 = vadd.f32 %v243, %v483
      %v756 = vadd.f32 %v244, %v487
      %v757 = vadd.f32 %v245, %v491
      %v758 = vadd.f32 %v246, %v495
      %v759 = vadd.f32 %v247, %v499
      %v760 = vadd.f32 %v248, %v503
      %v761 = vadd.f32 %v249, %v507
      %v762 = vadd.f32 %v250, %v511
      %v763 = vadd.f32 %v251, %v515
      %v764 = vadd.f32 %v252, %v519
      %v765 = vadd.f32 %v253, %v523
      %v766 = vadd.f32 %v254, %v527
      %v767 = vadd.f32 %v255, %v531
      %v768 = vadd.f32 %v256, %v535
      %v769 = vadd.f32 %v257, %v539
      %v770 = vadd.f32 %v258, %v543
      %v771 = vadd.f32 %v259, %v547
      %v772 = vadd.f32 %v260, %v551
      %v773 = vadd.f32 %v261, %v555
      %v774 = vadd.f32 %v262, %v559
      %v775 = vadd.f32 %v263, %v563
      %v776 = vadd.f32 %v264, %v567
      %v777 = vadd.f32 %v265, %v571
      %v778 = vadd.f32 %v266, %v575
      %v779 = vadd.f32 %v267, %v579
      %v780 = vadd.f32 %v268, %v583
      %v781 = vadd.f32 %v269, %v587
      %v782 = vadd.f32 %v270, %v591
      %v783 = vadd.f32 %v271, %v595
      %v784 = vadd.f32 %v272, %v599
      %v785 = vadd.f32 %v273, %v603
      %v786 = vadd.f32 %v274, %v607
      %v787 = vadd.f32 %v275, %v611
      %v788 = vadd.f32 %v276, %v615
      %v789 = vadd.f32 %v277, %v619
      %v790 = vadd.f32 %v278, %v623
      %v791 = vadd.f32 %v279, %v627
      %v792 = vadd.f32 %v280, %v631
      %v793 = vadd.f32 %v281, %v635
      %v794 = vadd.f32 %v282, %v639
      %v795 = vadd.f32 %v283, %v643
      %v796 = vadd.f32 %v284, %v647
      %v797 = vadd.f32 %v285, %v651
      %v798 = vadd.f32 %v286, %v655
      %v799 = vadd.f32 %v287, %v659
      %v800 = vadd.f32 %v288, %v663
      %v801 = vadd.f32 %v289, %v667
      %v802 = vadd.f32 %v290, %v671
      %v803 = vadd.f32 %v291, %v675
      %vm804 = vcmask 254976
      %805 = vst.msk [vmem:[%s226] sm:$0x3] %vm804, %v740
      %806 = vst.msk [vmem:[%s226 + $0x2] sm:$0x3] %vm804, %v741
      %807 = vst.msk [vmem:[%s226 + $0x4] sm:$0x3] %vm804, %v742
      %808 = vst.msk [vmem:[%s226 + $0x6] sm:$0x3] %vm804, %v743
      %809 = vst.msk [vmem:[%s226 + $0x8] sm:$0x3] %vm804, %v744
      %810 = vst.msk [vmem:[%s226 + $0xa] sm:$0x3] %vm804, %v745
      %811 = vst.msk [vmem:[%s226 + $0xc] sm:$0x3] %vm804, %v746
      %812 = vst.msk [vmem:[%s226 + $0xe] sm:$0x3] %vm804, %v747
      %813 = vst.msk [vmem:[%s226 + $0x10] sm:$0x3] %vm804, %v748
      %814 = vst.msk [vmem:[%s226 + $0x12] sm:$0x3] %vm804, %v749
      %815 = vst.msk [vmem:[%s226 + $0x14] sm:$0x3] %vm804, %v750
      %816 = vst.msk [vmem:[%s226 + $0x16] sm:$0x3] %vm804, %v751
      %817 = vst.msk [vmem:[%s226 + $0x18] sm:$0x3] %vm804, %v752
      %818 = vst.msk [vmem:[%s226 + $0x1a] sm:$0x3] %vm804, %v753
      %819 = vst.msk [vmem:[%s226 + $0x1c] sm:$0x3] %vm804, %v754
      %820 = vst.msk [vmem:[%s226 + $0x1e] sm:$0x3] %vm804, %v755
      %821 = vst.msk [vmem:[%s226 + $0x20] sm:$0x3] %vm804, %v756
      %822 = vst.msk [vmem:[%s226 + $0x22] sm:$0x3] %vm804, %v757
      %823 = vst.msk [vmem:[%s226 + $0x24] sm:$0x3] %vm804, %v758
      %824 = vst.msk [vmem:[%s226 + $0x26] sm:$0x3] %vm804, %v759
      %825 = vst.msk [vmem:[%s226 + $0x28] sm:$0x3] %vm804, %v760
      %826 = vst.msk [vmem:[%s226 + $0x2a] sm:$0x3] %vm804, %v761
      %827 = vst.msk [vmem:[%s226 + $0x2c] sm:$0x3] %vm804, %v762
      %828 = vst.msk [vmem:[%s226 + $0x2e] sm:$0x3] %vm804, %v763
      %829 = vst.msk [vmem:[%s226 + $0x30] sm:$0x3] %vm804, %v764
      %830 = vst.msk [vmem:[%s226 + $0x32] sm:$0x3] %vm804, %v765
      %831 = vst.msk [vmem:[%s226 + $0x34] sm:$0x3] %vm804, %v766
      %832 = vst.msk [vmem:[%s226 + $0x36] sm:$0x3] %vm804, %v767
      %833 = vst.msk [vmem:[%s226 + $0x38] sm:$0x3] %vm804, %v768
      %834 = vst.msk [vmem:[%s226 + $0x3a] sm:$0x3] %vm804, %v769
      %835 = vst.msk [vmem:[%s226 + $0x3c] sm:$0x3] %vm804, %v770
      %836 = vst.msk [vmem:[%s226 + $0x3e] sm:$0x3] %vm804, %v771
      %837 = vst.msk [vmem:[%s226 + $0x40] sm:$0x3] %vm804, %v772
      %838 = vst.msk [vmem:[%s226 + $0x42] sm:$0x3] %vm804, %v773
      %839 = vst.msk [vmem:[%s226 + $0x44] sm:$0x3] %vm804, %v774
      %840 = vst.msk [vmem:[%s226 + $0x46] sm:$0x3] %vm804, %v775
      %841 = vst.msk [vmem:[%s226 + $0x48] sm:$0x3] %vm804, %v776
      %842 = vst.msk [vmem:[%s226 + $0x4a] sm:$0x3] %vm804, %v777
      %843 = vst.msk [vmem:[%s226 + $0x4c] sm:$0x3] %vm804, %v778
      %844 = vst.msk [vmem:[%s226 + $0x4e] sm:$0x3] %vm804, %v779
      %845 = vst.msk [vmem:[%s226 + $0x50] sm:$0x3] %vm804, %v780
      %846 = vst.msk [vmem:[%s226 + $0x52] sm:$0x3] %vm804, %v781
      %847 = vst.msk [vmem:[%s226 + $0x54] sm:$0x3] %vm804, %v782
      %848 = vst.msk [vmem:[%s226 + $0x56] sm:$0x3] %vm804, %v783
      %849 = vst.msk [vmem:[%s226 + $0x58] sm:$0x3] %vm804, %v784
      %850 = vst.msk [vmem:[%s226 + $0x5a] sm:$0x3] %vm804, %v785
      %851 = vst.msk [vmem:[%s226 + $0x5c] sm:$0x3] %vm804, %v786
      %852 = vst.msk [vmem:[%s226 + $0x5e] sm:$0x3] %vm804, %v787
      %853 = vst.msk [vmem:[%s226 + $0x60] sm:$0x3] %vm804, %v788
      %854 = vst.msk [vmem:[%s226 + $0x62] sm:$0x3] %vm804, %v789
      %855 = vst.msk [vmem:[%s226 + $0x64] sm:$0x3] %vm804, %v790
      %856 = vst.msk [vmem:[%s226 + $0x66] sm:$0x3] %vm804, %v791
      %857 = vst.msk [vmem:[%s226 + $0x68] sm:$0x3] %vm804, %v792
      %858 = vst.msk [vmem:[%s226 + $0x6a] sm:$0x3] %vm804, %v793
      %859 = vst.msk [vmem:[%s226 + $0x6c] sm:$0x3] %vm804, %v794
      %860 = vst.msk [vmem:[%s226 + $0x6e] sm:$0x3] %vm804, %v795
      %861 = vst.msk [vmem:[%s226 + $0x70] sm:$0x3] %vm804, %v796
      %862 = vst.msk [vmem:[%s226 + $0x72] sm:$0x3] %vm804, %v797
      %863 = vst.msk [vmem:[%s226 + $0x74] sm:$0x3] %vm804, %v798
      %864 = vst.msk [vmem:[%s226 + $0x76] sm:$0x3] %vm804, %v799
      %865 = vst.msk [vmem:[%s226 + $0x78] sm:$0x3] %vm804, %v800
      %866 = vst.msk [vmem:[%s226 + $0x7a] sm:$0x3] %vm804, %v801
      %867 = vst.msk [vmem:[%s226 + $0x7c] sm:$0x3] %vm804, %v802
      %868 = vst.msk [vmem:[%s226 + $0x7e] sm:$0x3] %vm804, %v803
      %s869 = smul.u32 64, %s17
      %p870 = scmp.lt.s32.totalorder %s869, 255
      %s871 = scalar_select %p870, %s869, 255
      %p872 = scmp.lt.s32.totalorder %s18, 0
      %s873 = scalar_select %p872, %s18, 0
      %s874 = sadd.s32 %s873, %s871
      %s875 = smul.addr %s874, 2
      %s876 = scalar_lea.vmem %s2, %s875
      // Predicated region
      $region29: #{tpu_custom_call.1} parent=27 // pred_check
        %p877 = pneg %p101
      $region30: #{tpu_custom_call.1} parent=27 // pred_check_branch
        %879 = sbr.rel (%p877) target = $region32
      $region31: #{tpu_custom_call.1} parent=27 // pred_region
        %s880 = smul.u32 64, %s17
      $region32: #{tpu_custom_call.1} parent=27 // pred_fallthru
        _
    $region28: #{tpu_custom_call.1} parent=5 // pred_fallthru
      _
    %p881 = scmp.le.s32.totalorder 2, %s8
    // Predicated region
    $region33: #{tpu_custom_call.1} parent=5 // pred_check
      %p882 = pneg %p881
    $region34: #{tpu_custom_call.1} parent=5 // pred_check_branch
      %884 = sbr.rel (%p882) target = $region36
    $region35: #{tpu_custom_call.1} parent=5 // pred_region
      %s885 = ssub.s32 %s8, 2
      // Predicated region
      $region37: #{tpu_custom_call.1} parent=35 // pred_check
        %p886 = pneg %p107
      $region38: #{tpu_custom_call.1} parent=35 // pred_check_branch
        %888 = sbr.rel (%p886) target = $region40
      $region39: #{tpu_custom_call.1} parent=35 // pred_region
        %s889 = smul.u32 64, %s19
        %p890 = scmp.lt.s32.totalorder %s889, 255
        %s891 = scalar_select %p890, %s889, 255
        %p892 = scmp.lt.s32.totalorder %s20, 0
        %s893 = scalar_select %p892, %s20, 0
        %s894 = sadd.s32 %s893, %s891
        %s895 = smul.addr %s894, 2
        %s896 = scalar_lea.vmem %s2, %s895
      $region40: #{tpu_custom_call.1} parent=35 // pred_fallthru
        _
    $region36: #{tpu_custom_call.1} parent=5 // pred_fallthru
      _
  $region6: #{tpu_custom_call.1} parent=0 // loop_footer
    %s12 = sadd.s32 1, %s8
  $region7: #{tpu_custom_call.1} parent=0 // loop_footer_branch
    %7 = sbr.rel target = $region3
  $region8: #{tpu_custom_call.1} parent=0 // loop_exit
    _

</llo_original>
